<compile_context>
chip_gen: v7x
topology: tpu7x:2x2x1
jax: 0.10.0
libtpu: 0.0.40
codegen_flags: <defaults>
</compile_context>

<pallas_src>
import math

import jax
import jax.numpy as jnp
from jax import lax
from jax.experimental import pallas as pl
from jax.experimental.pallas import tpu as pltpu

_NEG_INF = -1e30                 # finite mask fill: avoids inf-inf -> NaN hazards
_VMEM_LIMIT = 64 * 1024 * 1024   # <= physical VMEM on v5e/v6e/v7x


def _pick_tile(dim, candidates):
    """Largest candidate that evenly divides dim, else the full dim."""
    for c in candidates:
        if c <= dim and dim % c == 0:
            return c
    return dim


# ---------------------------------------------------------------------------
# Tiled linear (x @ W + b) kernel — used for the fused QKV and output proj.
# ---------------------------------------------------------------------------
def _linear_kernel(x_ref, w_ref, b_ref, o_ref):
    acc = jnp.dot(x_ref[...], w_ref[...], preferred_element_type=jnp.float32)
    o_ref[...] = (acc + b_ref[...]).astype(o_ref.dtype)


def _linear(x2d, w, b, out_dtype):
    """x2d: (M, K) bf16, w: (K, N) bf16, b: (N,) f32 -> (M, N) out_dtype."""
    M, K = x2d.shape
    N = w.shape[1]
    tm = _pick_tile(M, (256, 128, 64, 32, 16, 8))
    tn = _pick_tile(N, (512, 256, 128))
    grid = (M // tm, N // tn)
    return pl.pallas_call(
        _linear_kernel,
        out_shape=jax.ShapeDtypeStruct((M, N), out_dtype),
        grid=grid,
        in_specs=[
            pl.BlockSpec((tm, K), lambda i, j: (i, 0)),
            pl.BlockSpec((K, tn), lambda i, j: (0, j)),
            pl.BlockSpec((1, tn), lambda i, j: (0, j)),
        ],
        out_specs=pl.BlockSpec((tm, tn), lambda i, j: (i, j)),
        compiler_params=pltpu.CompilerParams(
            dimension_semantics=("parallel", "parallel"),
            vmem_limit_bytes=_VMEM_LIMIT),
    )(x2d, w, b.reshape(1, N))


# ---------------------------------------------------------------------------
# Flash attention kernel: grid = (B*H, q_tiles, kv_tiles), kv innermost.
# ---------------------------------------------------------------------------
def _make_flash_kernel(tq, tkv, hd, scale):
    def kernel(q_ref, k_ref, v_ref, o_ref, m_sc, l_sc, acc_sc):
        qi = pl.program_id(1)
        ki = pl.program_id(2)

        @pl.when(ki == 0)
        def _init():
            m_sc[...] = jnp.full((tq, 1), _NEG_INF, jnp.float32)
            l_sc[...] = jnp.zeros((tq, 1), jnp.float32)
            acc_sc[...] = jnp.zeros((tq, hd), jnp.float32)

        # Skip KV tiles that lie entirely in the causal future of this Q tile.
        @pl.when(ki * tkv <= qi * tq + (tq - 1))
        def _compute():
            q = q_ref[0]   # (tq, hd)  bf16
            k = k_ref[0]   # (tkv, hd) bf16
            v = v_ref[0]   # (tkv, hd) bf16

            # s = q @ k^T (contract over hd), f32 accumulation on the MXU.
            s = lax.dot_general(q, k, (((1,), (1,)), ((), ())),
                                preferred_element_type=jnp.float32) * scale

            # Tile-local causal mask (tq, tkv) — never a full (T, T) mask.
            row = qi * tq + lax.broadcasted_iota(jnp.int32, (tq, tkv), 0)
            col = ki * tkv + lax.broadcasted_iota(jnp.int32, (tq, tkv), 1)
            s = jnp.where(col <= row, s, _NEG_INF)

            m_prev = m_sc[...]
            m_new = jnp.maximum(m_prev, s.max(axis=-1, keepdims=True))
            alpha = jnp.exp(m_prev - m_new)
            p = jnp.exp(s - m_new)
            l_sc[...] = alpha * l_sc[...] + p.sum(axis=-1, keepdims=True)
            acc_sc[...] = alpha * acc_sc[...] + jnp.dot(
                p.astype(v.dtype), v, preferred_element_type=jnp.float32)
            m_sc[...] = m_new

        @pl.when(ki == pl.num_programs(2) - 1)
        def _finalize():
            inv = pl.reciprocal(l_sc[...], approx=True)   # EUP, ~free
            o_ref[0] = (acc_sc[...] * inv).astype(o_ref.dtype)

    return kernel


def _flash_attention(q, k, v, n_head):
    """q, k, v: (B, T, C) bf16 -> (B, T, C) bf16, causal attention."""
    B, T, C = q.shape
    hd = C // n_head
    scale = 1.0 / math.sqrt(hd)

    # Lane-contiguous per-head layout: (B*H, T, hd).  Wrapper-side XLA reshape.
    def split_heads(t):
        return t.reshape(B, T, n_head, hd).transpose(0, 2, 1, 3).reshape(
            B * n_head, T, hd)

    qh, kh, vh = split_heads(q), split_heads(k), split_heads(v)

    tq = _pick_tile(T, (256, 128, 64, 32, 16, 8))
    tkv = _pick_tile(T, (256, 128, 64, 32, 16, 8))
    grid = (B * n_head, T // tq, T // tkv)

    out = pl.pallas_call(
        _make_flash_kernel(tq, tkv, hd, scale),
        out_shape=jax.ShapeDtypeStruct((B * n_head, T, hd), q.dtype),
        grid=grid,
        in_specs=[
            pl.BlockSpec((1, tq, hd), lambda b, qi, ki: (b, qi, 0)),
            pl.BlockSpec((1, tkv, hd), lambda b, qi, ki: (b, ki, 0)),
            pl.BlockSpec((1, tkv, hd), lambda b, qi, ki: (b, ki, 0)),
        ],
        out_specs=pl.BlockSpec((1, tq, hd), lambda b, qi, ki: (b, qi, 0)),
        scratch_shapes=[
            pltpu.VMEM((tq, 1), jnp.float32),    # m (running max)
            pltpu.VMEM((tq, 1), jnp.float32),    # l (running denom)
            pltpu.VMEM((tq, hd), jnp.float32),   # acc (unnormalized output)
        ],
        compiler_params=pltpu.CompilerParams(
            dimension_semantics=("parallel", "parallel", "arbitrary"),
            vmem_limit_bytes=_VMEM_LIMIT),
    )(qh, kh, vh)

    return out.reshape(B, n_head, T, hd).transpose(0, 2, 1, 3).reshape(B, T, C)


# ---------------------------------------------------------------------------
# Full forward pass (matches the PyTorch module in eval mode).
# ---------------------------------------------------------------------------
def causal_self_attention(x, params, n_head):
    """x: (B, T, C) float32.  params: (in,out) weights + (C,) biases."""
    B, T, C = x.shape
    compute_dtype = jnp.bfloat16   # MXU operand dtype; accumulation stays f32

    x2d = x.astype(compute_dtype).reshape(B * T, C)

    # Fused QKV projection: one (C, 3C) matmul instead of three (C, C) ones.
    w_qkv = jnp.concatenate(
        [params['wq'], params['wk'], params['wv']], axis=1).astype(compute_dtype)
    b_qkv = jnp.concatenate(
        [params['bq'], params['bk'], params['bv']]).astype(jnp.float32)

    qkv = _linear(x2d, w_qkv, b_qkv, compute_dtype)            # (B*T, 3C)
    q = qkv[:, 0 * C:1 * C].reshape(B, T, C)
    k = qkv[:, 1 * C:2 * C].reshape(B, T, C)
    v = qkv[:, 2 * C:3 * C].reshape(B, T, C)

    y = _flash_attention(q, k, v, n_head)                      # (B, T, C) bf16

    # Output projection back to the input dtype.
    out = _linear(y.reshape(B * T, C),
                  params['wp'].astype(compute_dtype),
                  params['bp'].astype(jnp.float32),
                  x.dtype)
    # attn_drop / resid_drop are identity (eval mode).
    return out.reshape(B, T, C)


def reference_attention(x, params, n_head):
    """Plain-JAX f32 reference replicating the PyTorch forward (eval mode)."""
    B, T, C = x.shape
    hd = C // n_head
    q = x @ params['wq'] + params['bq']
    k = x @ params['wk'] + params['bk']
    v = x @ params['wv'] + params['bv']
    q = q.reshape(B, T, n_head, hd).transpose(0, 2, 1, 3)
    k = k.reshape(B, T, n_head, hd).transpose(0, 2, 1, 3)
    v = v.reshape(B, T, n_head, hd).transpose(0, 2, 1, 3)
    att = (q @ k.transpose(0, 1, 3, 2)) * (1.0 / math.sqrt(hd))
    mask = jnp.tril(jnp.ones((T, T)))[None, None]
    att = jnp.where(mask == 0, -jnp.inf, att)
    att = jax.nn.softmax(att, axis=-1)
    y = att @ v
    y = y.transpose(0, 2, 1, 3).reshape(B, T, C)
    return y @ params['wp'] + params['bp']


if __name__ == "__main__":
    B, T, C, n_head = 2, 8, 32, 4

    key = jax.random.PRNGKey(0)
    keys = jax.random.split(key, 9)
    scale = 1.0 / math.sqrt(C)
    params = {
        'wq': jax.random.normal(keys[0], (C, C), jnp.float32) * scale,
        'bq': jax.random.normal(keys[1], (C,), jnp.float32) * 0.01,
        'wk': jax.random.normal(keys[2], (C, C), jnp.float32) * scale,
        'bk': jax.random.normal(keys[3], (C,), jnp.float32) * 0.01,
        'wv': jax.random.normal(keys[4], (C, C), jnp.float32) * scale,
        'bv': jax.random.normal(keys[5], (C,), jnp.float32) * 0.01,
        'wp': jax.random.normal(keys[6], (C, C), jnp.float32) * scale,
        'bp': jax.random.normal(keys[7], (C,), jnp.float32) * 0.01,
    }
    x = jax.random.normal(keys[8], (B, T, C), jnp.float32)

    out = causal_self_attention(x, params, n_head)
    out = jax.block_until_ready(out)

    ref = reference_attention(x, params, n_head)
    assert out.shape == (B, T, C)
    # Tolerance loosened vs f32 reference because MXU operands are bf16
    # (accumulation remains f32, so error stays bounded).
    assert jnp.allclose(out, ref, atol=1e-1, rtol=1e-1), "mismatch vs reference"

    print("KERNEL_OK")
</pallas_src>

<mosaic_0001>
module attributes {stable_mosaic.version = 11 : i64} {
  func.func @_linear_kernel(%arg0: i32, %arg1: i32, %arg2: memref<16x32xbf16, #tpu.memory_space<vmem>>, %arg3: memref<32x96xbf16, #tpu.memory_space<vmem>>, %arg4: memref<1x96xf32, #tpu.memory_space<vmem>>, %arg5: memref<16x96xbf16, #tpu.memory_space<vmem>>) attributes {dimension_semantics = [#tpu.dimension_semantics<parallel>, #tpu.dimension_semantics<parallel>], iteration_bounds = array<i64: 1, 1>, scalar_prefetch = 0 : i64, scratch_operands = 0 : i64, tpu.core_type = #tpu.core_type<tc>, window_params = [{transform_indices = @transform_0, window_bounds = array<i64: 16, 32>}, {transform_indices = @transform_1, window_bounds = array<i64: 32, 96>}, {transform_indices = @transform_2, window_bounds = array<i64: 1, 96>}, {transform_indices = @transform_3, window_bounds = array<i64: 16, 96>}]} {
    %c0 = arith.constant 0 : index
    %c0_0 = arith.constant 0 : index
    %0 = vector.load %arg2[%c0, %c0_0] : memref<16x32xbf16, #tpu.memory_space<vmem>>, vector<16x32xbf16>
    %c0_1 = arith.constant 0 : index
    %c0_2 = arith.constant 0 : index
    %1 = vector.load %arg3[%c0_1, %c0_2] : memref<32x96xbf16, #tpu.memory_space<vmem>>, vector<32x96xbf16>
    %cst = arith.constant dense<0.000000e+00> : vector<16x96xf32>
    %2 = tpu.matmul %0, %1, %cst {dimension_numbers = #tpu.dot_dimension_numbers<[1], [0], [0], [1], [0, 0, 1, 1], [], []>} : vector<16x32xbf16>, vector<32x96xbf16>, vector<16x96xf32> -> vector<16x96xf32>
    %c0_3 = arith.constant 0 : index
    %c0_4 = arith.constant 0 : index
    %3 = vector.load %arg4[%c0_3, %c0_4] : memref<1x96xf32, #tpu.memory_space<vmem>>, vector<1x96xf32>
    %4 = vector.broadcast %3 : vector<1x96xf32> to vector<16x96xf32>
    %5 = arith.addf %2, %4 : vector<16x96xf32>
    %6 = arith.truncf %5 : vector<16x96xf32> to vector<16x96xbf16>
    %c0_5 = arith.constant 0 : index
    %c0_6 = arith.constant 0 : index
    %7 = vector.load %arg5[%c0_5, %c0_6] : memref<16x96xbf16, #tpu.memory_space<vmem>>, vector<16x96xbf16>
    tpu.vector_store %arg5[%c0_5, %c0_6], %6 {strides = array<i32>} : memref<16x96xbf16, #tpu.memory_space<vmem>>, vector<16x96xbf16>,
    return
  }
  func.func @transform_0(%arg0: i32, %arg1: i32) -> (i32, i32) {
    %c0_i32 = arith.constant 0 : i32
    %c0_i32_0 = arith.constant 0 : i32
    return %arg0, %c0_i32 : i32, i32
  }
  func.func @transform_1(%arg0: i32, %arg1: i32) -> (i32, i32) {
    %c0_i32 = arith.constant 0 : i32
    %c0_i32_0 = arith.constant 0 : i32
    return %c0_i32, %arg1 : i32, i32
  }
  func.func @transform_2(%arg0: i32, %arg1: i32) -> (i32, i32) {
    %c0_i32 = arith.constant 0 : i32
    %c0_i32_0 = arith.constant 0 : i32
    return %c0_i32, %arg1 : i32, i32
  }
  func.func @transform_3(%arg0: i32, %arg1: i32) -> (i32, i32) {
    %c0_i32 = arith.constant 0 : i32
    return %arg0, %arg1 : i32, i32
  }
}

</mosaic_0001>

<llo_original>
// kernel: tpu_custom_call.1
$region0: #{tpu_custom_call.1}
  #allocation0 [shape = 'u32[]', space=smem, size = 0x4, offset = 0x4, fixed_abs, tag = 'smem constant byte address 0x4 - core index']
  #allocation1 [shape = 'u32[144,128]{1,0:T(1,128)}', space=vmem, size = 0x12000, scoped, tag = 'internal scratch']
  %s0 = inlined_call_operand.hbm [shape: bf16[16,32], index: 0, kind: input, shape index: {}]
  %s1 = inlined_call_operand.hbm [shape: bf16[32,96], index: 1, kind: input, shape index: {}]
  %s2 = inlined_call_operand.hbm [shape: f32[1,96], index: 2, kind: input, shape index: {}]
  %s3 = inlined_call_operand.hbm [shape: bf16[16,96], index: 3, kind: output, shape index: {}]
  %s4 = sld [smem:[#allocation0]]
  $region34: #{tpu_custom_call.1} parent=0
    _
  %s6 = ssub.s32 1, %s4
  %s7 = scalar_select 0, %s6, %s4
  $region1: #{tpu_custom_call.1} parent=0
    #allocation2 [shape = 'u8[4096]{0}', space=vmem, size = 0x1000, scoped, tag = 'input window, operand 0, single buffered']
    #allocation3 [shape = 's32[1]{0}', space=sflag, size = 0x4, scoped, tag = 'scoped memory for tpu_custom_call.1']
    #allocation4 [shape = 's32[1]{0}', space=sflag, size = 0x4, scoped, tag = 'scoped memory for tpu_custom_call.1']
    #allocation5 [shape = 'u8[8192]{0}', space=vmem, size = 0x2000, scoped, tag = 'input window, operand 1, single buffered']
    #allocation6 [shape = 's32[1]{0}', space=sflag, size = 0x4, scoped, tag = 'scoped memory for tpu_custom_call.1']
    #allocation7 [shape = 'u8[512]{0}', space=vmem, size = 0x400, scoped, tag = 'input window, operand 2, single buffered']
    #allocation8 [shape = 'u8[4096]{0}', space=vmem, size = 0x1000, scoped, tag = 'output window, operand 0, single buffered']
    %8 = vsyncpa [#allocation3], 0
    %9 = vsyncpa [#allocation6], 0
    %10 = vsyncpa [#allocation4], 0
    // Predicated region
    $region2: #{tpu_custom_call.1} parent=1 // pred_check
      _
    $region3: #{tpu_custom_call.1} parent=1 // pred_check_branch
      %12 = sbr.rel (0) target = $region5
    $region4: #{tpu_custom_call.1} parent=1 // pred_region
      %s14 = ssub.s32 128, 128
      %15 = vsyncadd [#allocation3], %s14
      %s16 = sshll.u32 [#allocation2], 4
      %s17 = int_to_ptr.vmem [resolvable:$true] %s16
      %22 = dma.hbm_to_vmem [thread:$0]  %s0, 128, %s17, [#allocation3], 64, 64, 4
    $region5: #{tpu_custom_call.1} parent=1 // pred_fallthru
      _
    // Predicated region
    $region6: #{tpu_custom_call.1} parent=1 // pred_check
      _
    $region7: #{tpu_custom_call.1} parent=1 // pred_check_branch
      %24 = sbr.rel (0) target = $region9
    $region8: #{tpu_custom_call.1} parent=1 // pred_region
      %s26 = ssub.s32 256, 256
      %27 = vsyncadd [#allocation6], %s26
      %s28 = sshll.u32 [#allocation5], 4
      %s29 = int_to_ptr.vmem [resolvable:$true] %s28
      %34 = dma.hbm_to_vmem [thread:$0]  %s1, 256, %s29, [#allocation6], 64, 64, 4
    $region9: #{tpu_custom_call.1} parent=1 // pred_fallthru
      _
    // Predicated region
    $region10: #{tpu_custom_call.1} parent=1 // pred_check
      _
    $region11: #{tpu_custom_call.1} parent=1 // pred_check_branch
      %36 = sbr.rel (0) target = $region13
    $region12: #{tpu_custom_call.1} parent=1 // pred_region
      %s38 = ssub.s32 16, 16
      %39 = vsyncadd [#allocation6], %s38
      %s41 = sshll.u32 [#allocation7], 4
      %s42 = int_to_ptr.vmem [resolvable:$true] %s41
      %44 = dma.hbm_to_vmem [thread:$0]  %s2, 16, %s42, [#allocation6]
    $region13: #{tpu_custom_call.1} parent=1 // pred_fallthru
      _
    // Predicated region
    $region14: #{tpu_custom_call.1} parent=1 // pred_check
      _
    $region15: #{tpu_custom_call.1} parent=1 // pred_check_branch
      %46 = sbr.rel (0) target = $region17
    $region16: #{tpu_custom_call.1} parent=1 // pred_region
      %47 = dma.done [#allocation3], 128
    $region17: #{tpu_custom_call.1} parent=1 // pred_fallthru
      _
    // Predicated region
    $region18: #{tpu_custom_call.1} parent=1 // pred_check
      _
    $region19: #{tpu_custom_call.1} parent=1 // pred_check_branch
      %49 = sbr.rel (0) target = $region21
    $region20: #{tpu_custom_call.1} parent=1 // pred_region
      %50 = dma.done [#allocation6], 256
    $region21: #{tpu_custom_call.1} parent=1 // pred_fallthru
      _
    // Predicated region
    $region22: #{tpu_custom_call.1} parent=1 // pred_check
      _
    $region23: #{tpu_custom_call.1} parent=1 // pred_check_branch
      %52 = sbr.rel (0) target = $region25
    $region24: #{tpu_custom_call.1} parent=1 // pred_region
      %53 = dma.done [#allocation6], 16
    $region25: #{tpu_custom_call.1} parent=1 // pred_fallthru
      _
    %v55 = vld [vmem:[#allocation2] sm:$0xf]
    %v56 = vld [vmem:[#allocation2 + $0x4] sm:$0xf]
    %v57 = vld [vmem:[#allocation5] sm:$0xf]
    %v58 = vld [vmem:[#allocation5 + $0x4] sm:$0xf]
    %v59 = vld [vmem:[#allocation5 + $0x8] sm:$0xf]
    %v60 = vld [vmem:[#allocation5 + $0xc] sm:$0xf]
    %v61 = vld [vmem:[#allocation7] sm:$0x1]
    %v63 = vlaneseq
    %v64 = vshrl.u32 %v63, 7
    %v65 = vsub.s32 0, %v64
    %v66 = vrot.slane %v61, %v65
    %v70 = vunpack.c.l.b16 %v55
    %v71 = vunpack.c.l.b16 %v56
    %v72 = vpack.c.b16 %v71, %v70
    %v77 = vunpack.c.l.b16 %v57
    %v78 = vunpack.c.l.b16 %v58
    %v79 = vunpack.c.l.b16 %v59
    %v80 = vunpack.c.l.b16 %v60
    %v81 = vpack.c.b16 %v78, %v77
    %v82 = vpack.c.b16 %v80, %v79
    %vm85 = vcmask 261120
    %v87 = vsel %vm85, %v72, 0
    %89 = vmatprep.subr.bf16.mxu0 0
    %90 = vmatpush1.bf16.msra.mxu0 %v81
    %91 = vmatprep.subr.bf16.mxu0 0
    %92 = vmatpush1.bf16.msra.mxu0 %v82
    %93 = vmatprep.subr.bf16.mxu0 0
    %94 = vmatpush1.bf16.msra.mxu0 0
    %95 = vmatprep.subr.bf16.mxu0 0
    %96 = vmatpush1.bf16.msra.mxu0 0
    %97 = vmatprep.subr.bf16.mxu0 0
    %98 = vmatpush1.bf16.msra.mxu0 0
    %99 = vmatprep.subr.bf16.mxu0 0
    %100 = vmatpush1.bf16.msra.mxu0 0
    %101 = vmatprep.subr.bf16.mxu0 0
    %102 = vmatpush1.bf16.msra.mxu0 0
    %103 = vmatprep.subr.bf16.mxu0 0
    %104 = vmatpush1.bf16.msra.mxu0 0
    %105 = vmatprep.subr.bf16.mxu0 0
    %106 = vmatpush1.bf16.msra.mxu0 0
    %107 = vmatprep.subr.bf16.mxu0 0
    %108 = vmatpush1.bf16.msra.mxu0 0
    %109 = vmatprep.subr.bf16.mxu0 0
    %110 = vmatpush1.bf16.msra.mxu0 0
    %111 = vmatprep.subr.bf16.mxu0 0
    %112 = vmatpush1.bf16.msra.mxu0 0
    %113 = vmatprep.subr.bf16.mxu0 0
    %114 = vmatpush1.bf16.msra.mxu0 0
    %115 = vmatprep.subr.bf16.mxu0 0
    %116 = vmatpush1.bf16.msra.mxu0 0
    %117 = vmatprep.subr.bf16.mxu0 0
    %118 = vmatpush1.bf16.msra.mxu0 0
    %119 = vmatprep.subr.bf16.mxu0 0
    %120 = vmatpush1.bf16.msra.mxu0 0
    %121 = vmatprep.mubr.bf16.mxu0 0
    %122 = vmatmul.mubr.bf16.gmra.mrb[0].mxu0 %v87
    %v123 = vpop.f32.mrb[0].mxu0
    %v124 = vadd.f32 %v66, %v123
    %v125 = vpop.f32.mrb[0].mxu0
    %v126 = vpop.f32.mrb[0].mxu0
    %v127 = vadd.f32 %v66, %v126
    %v128 = vpop.f32.mrb[0].mxu0
    %129 = vdwg.mxu0
    %v130 = vpack.c.bf16 %v127, %v124
    %v132 = vunpack.c.l.b16 %v130
    %v133 = vunpack.c.h.b16 %v130
    %v134 = vpack.c.b16 %v132, %v132
    %v135 = vpack.c.b16 %v133, %v133
    %vm138 = vcmask 781312
    %139 = vst.msk [vmem:[#allocation8] sm:$0xf] %vm138, %v134
    %140 = vst.msk [vmem:[#allocation8 + $0x4] sm:$0xf] %vm138, %v135
    // Predicated region
    $region26: #{tpu_custom_call.1} parent=1 // pred_check
      _
    $region27: #{tpu_custom_call.1} parent=1 // pred_check_branch
      %142 = sbr.rel (0) target = $region29
    $region28: #{tpu_custom_call.1} parent=1 // pred_region
      %s144 = ssub.s32 128, 128
      %145 = vsyncadd [#allocation4], %s144
      %s146 = sshll.u32 [#allocation8], 4
      %s147 = int_to_ptr.vmem [resolvable:$true] %s146
      %152 = dma.vmem_to_hbm [thread:$0]  %s147, 128, %s3, [#allocation4], 64, 64, 4
    $region29: #{tpu_custom_call.1} parent=1 // pred_fallthru
      _
    // Predicated region
    $region30: #{tpu_custom_call.1} parent=1 // pred_check
      _
    $region31: #{tpu_custom_call.1} parent=1 // pred_check_branch
      %154 = sbr.rel (0) target = $region33
    $region32: #{tpu_custom_call.1} parent=1 // pred_region
      %155 = dma.done [#allocation4], 128
    $region33: #{tpu_custom_call.1} parent=1 // pred_fallthru
      _
    %156 = vsyncpa [#allocation3], 1
    %157 = vsyncpa [#allocation6], 1
    %158 = vsyncpa [#allocation4], 1

</llo_original>
